<compile_context>
chip_gen: v6e
topology: v6e:2x2x1
jax: 0.10.0
libtpu: 0.0.40
codegen_flags: <defaults>
</compile_context>

<pallas_src>
import functools

import jax
import jax.numpy as jnp
from jax.experimental import pallas as pl
from jax.experimental.pallas import tpu as pltpu

C_IN = 176
C_OUT = 176
BN_EPS = 1e-5
N_CO_TILES = 2                  # v7x: one C_OUT tile per TensorCore
TILE_CO = C_OUT // N_CO_TILES   # 88 -> multiple of 8, sublane-aligned


def _conv1x1_bn_kernel(x_ref, w_ref, g_ref, b_ref, o_ref, y_ref, *,
                       n_batch, hw, hw_pad):
    # x_ref:  (N, C_IN, HW_PAD)    zero-padded, pure-reshaped NCHW activations
    # w_ref:  (TILE_CO, C_IN)      1x1 conv weight tile (kernel dims squeezed)
    # g_ref:  (TILE_CO, 1)         BN gamma tile
    # b_ref:  (TILE_CO, 1)         BN beta tile
    # o_ref:  (N, TILE_CO, HW_PAD) output tile
    # y_ref:  (N, TILE_CO, HW_PAD) VMEM scratch for the raw conv output
    tile_co = w_ref.shape[0]
    total = jnp.float32(n_batch * hw)
    w = w_ref[...]

    # Pass 1: 1x1 conv == per-image matmul on the MXU.  Stage y in VMEM scratch
    # and accumulate the per-channel sum.  N is tiny & static -> unrolled.
    sum_y = jnp.zeros((tile_co, 1), jnp.float32)
    for n in range(n_batch):
        y = jnp.dot(w, x_ref[n], preferred_element_type=jnp.float32)
        y_ref[n] = y
        sum_y = sum_y + jnp.sum(y, axis=1, keepdims=True)
    mean = sum_y / total                                    # (TILE_CO, 1)

    # Pass 2: centered sum of squares (two-pass variance; no E[y^2]-E[y]^2
    # cancellation).  Padded columns hold y == 0 exactly, so each contributes
    # mean^2 -- remove that contribution analytically instead of masking.
    sum_csq = jnp.zeros((tile_co, 1), jnp.float32)
    for n in range(n_batch):
        d = y_ref[n] - mean
        sum_csq = sum_csq + jnp.sum(d * d, axis=1, keepdims=True)
    n_pad_cols = n_batch * (hw_pad - hw)
    if n_pad_cols:
        sum_csq = sum_csq - jnp.float32(n_pad_cols) * mean * mean
    var = sum_csq / total                                   # biased variance
    inv_std = jax.lax.rsqrt(var + jnp.float32(BN_EPS))

    # Folded BN affine: o = y * scale + shift
    scale = g_ref[...] * inv_std
    shift = b_ref[...] - mean * scale

    # Pass 3: lane-dense stores of the normalized output.
    for n in range(n_batch):
        o_ref[n] = (y_ref[n] * scale + shift).astype(o_ref.dtype)


def conv1x1_batchnorm(x_nchw, weight, gamma, beta):
    """x_nchw: (N, C_IN, H, W) f32.  weight: (C_OUT, C_IN) f32 (1x1 kernel
    squeezed).  gamma/beta: (C_OUT,) f32.  Returns (N, C_OUT, H, W) f32."""
    n, c, h, w = x_nchw.shape
    assert c == C_IN and weight.shape == (C_OUT, C_IN)
    hw = h * w
    hw_pad = pl.cdiv(hw, 128) * 128       # lane-dense last dim (196 -> 256)

    # Pure reshape (no transpose); zero-pad the lane axis so every kernel store
    # is an unmasked vst.  gamma/beta reshapes are metadata-only.
    x3 = x_nchw.reshape(n, c, hw)
    if hw_pad != hw:
        x3 = jnp.pad(x3, ((0, 0), (0, 0), (0, hw_pad - hw)))
    g2 = gamma.reshape(C_OUT, 1)
    b2 = beta.reshape(C_OUT, 1)

    cost = pl.CostEstimate(
        flops=2 * n * hw_pad * C_IN * C_OUT + 8 * n * hw_pad * C_OUT,
        transcendentals=C_OUT,
        bytes_accessed=4 * (n * C_IN * hw_pad + C_IN * C_OUT + 2 * C_OUT
                            + n * C_OUT * hw_pad),
    )

    kernel = functools.partial(_conv1x1_bn_kernel, n_batch=n, hw=hw,
                               hw_pad=hw_pad)

    # VMEM footprint (< 1 MB incl. double buffers) is far below the scoped
    # default on v5e/v6e/v7x -> no vmem_limit_bytes / HW tiling needed at this
    # shape.  If reused at much larger spatial sizes, add a grid axis over HW
    # with partial sums sized for v7x's 64 MiB VMEM.
    out3 = pl.pallas_call(
        kernel,
        out_shape=jax.ShapeDtypeStruct((n, C_OUT, hw_pad), jnp.float32),
        grid=(N_CO_TILES,),
        in_specs=[
            # x: whole array, constant block index -> fetched once, reused.
            pl.BlockSpec((n, C_IN, hw_pad), lambda i: (0, 0, 0)),
            pl.BlockSpec((TILE_CO, C_IN), lambda i: (i, 0)),
            pl.BlockSpec((TILE_CO, 1), lambda i: (i, 0)),
            pl.BlockSpec((TILE_CO, 1), lambda i: (i, 0)),
        ],
        out_specs=pl.BlockSpec((n, TILE_CO, hw_pad), lambda i: (0, i, 0)),
        scratch_shapes=[pltpu.VMEM((n, TILE_CO, hw_pad), jnp.float32)],
        compiler_params=pltpu.CompilerParams(
            dimension_semantics=("parallel",)),
        cost_estimate=cost,
    )(x3, weight, g2, b2)

    if hw_pad != hw:
        out3 = out3[:, :, :hw]
    return out3.reshape(n, C_OUT, h, w)


def _reference(x_nchw, weight, gamma, beta):
    """Pure-JAX reference (same math as PyTorch training-mode forward)."""
    n, c, h, w = x_nchw.shape
    x3 = x_nchw.reshape(n, c, h * w)
    y = jnp.einsum("oc,nch->noh", weight, x3)                    # 1x1 conv
    mean = jnp.mean(y, axis=(0, 2), keepdims=True)
    var = jnp.mean((y - mean) ** 2, axis=(0, 2), keepdims=True)  # biased
    out = (y - mean) * jax.lax.rsqrt(var + BN_EPS)
    out = out * gamma[None, :, None] + beta[None, :, None]
    return out.reshape(n, c, h, w)


if __name__ == "__main__":
    key = jax.random.PRNGKey(0)
    kx, kw, kg, kb = jax.random.split(key, 4)

    # Shapes consistent with the module: x258 = randn(1, 176, 14, 14).
    N, H, W = 1, 14, 14
    x = jax.random.normal(kx, (N, C_IN, H, W), dtype=jnp.float32)

    # Deterministic synthetic parameters (shapes from the module __init__).
    # Conv2d(176, 176, 1, 1, bias=False): weight (176, 176, 1, 1) -> squeezed.
    weight = jax.random.normal(kw, (C_OUT, C_IN), dtype=jnp.float32) * 0.05
    # BatchNorm2d(176) affine params.
    gamma = 1.0 + 0.1 * jax.random.normal(kg, (C_OUT,), dtype=jnp.float32)
    beta = 0.1 * jax.random.normal(kb, (C_OUT,), dtype=jnp.float32)

    out = conv1x1_batchnorm(x, weight, gamma, beta)
    jax.block_until_ready(out)
    assert out.shape == (N, C_OUT, H, W)

    ref = _reference(x, weight, gamma, beta)
    jax.block_until_ready(ref)
    max_err = float(jnp.max(jnp.abs(out - ref)))
    assert max_err < 1e-3, f"mismatch vs reference: {max_err}"

    # TODO(synk): PyTorch training-mode forward also updates the BN
    # running_mean/running_var buffers (momentum=0.1); that side effect is not
    # part of the returned tensor and is not modeled here.
    print("KERNEL_OK")
</pallas_src>

<mosaic_0001>
module attributes {stable_mosaic.version = 11 : i64} {
  func.func @_conv1x1_bn_kernel(%arg0: i32, %arg1: memref<1x176x256xf32, #tpu.memory_space<vmem>>, %arg2: memref<88x176xf32, #tpu.memory_space<vmem>>, %arg3: memref<88x1xf32, #tpu.memory_space<vmem>>, %arg4: memref<88x1xf32, #tpu.memory_space<vmem>>, %arg5: memref<1x88x256xf32, #tpu.memory_space<vmem>>, %arg6: memref<1x88x256xf32, #tpu.memory_space<vmem>>) attributes {dimension_semantics = [#tpu.dimension_semantics<parallel>], iteration_bounds = array<i64: 2>, scalar_prefetch = 0 : i64, scratch_operands = 1 : i64, tpu.core_type = #tpu.core_type<tc>, window_params = [{pipeline_mode = #tpu.pipeline_mode<synchronous>, transform_indices = @transform_0, window_bounds = array<i64: 1, 176, 256>}, {transform_indices = @transform_1, window_bounds = array<i64: 88, 176>}, {transform_indices = @transform_2, window_bounds = array<i64: 88, 1>}, {transform_indices = @transform_3, window_bounds = array<i64: 88, 1>}, {transform_indices = @transform_4, window_bounds = array<i64: 1, 88, 256>}]} {
    %c0 = arith.constant 0 : index
    %c0_0 = arith.constant 0 : index
    %0 = vector.load %arg2[%c0, %c0_0] : memref<88x176xf32, #tpu.memory_space<vmem>>, vector<88x176xf32>
    %cst = arith.constant 0.000000e+00 : f32
    %1 = vector.broadcast %cst : f32 to vector<88x1xf32>
    %c0_1 = arith.constant 0 : index
    %c0_2 = arith.constant 0 : index
    %c0_3 = arith.constant 0 : index
    %2 = vector.load %arg1[%c0_1, %c0_2, %c0_3] : memref<1x176x256xf32, #tpu.memory_space<vmem>>, vector<1x176x256xf32>
    %3 = vector.shape_cast %2 : vector<1x176x256xf32> to vector<176x256xf32>
    %cst_4 = arith.constant dense<0.000000e+00> : vector<88x256xf32>
    %4 = tpu.matmul %0, %3, %cst_4 {dimension_numbers = #tpu.dot_dimension_numbers<[1], [0], [0], [1], [0, 0, 1, 1], [], []>} : vector<88x176xf32>, vector<176x256xf32>, vector<88x256xf32> -> vector<88x256xf32>
    %c0_5 = arith.constant 0 : index
    %c0_6 = arith.constant 0 : index
    %c0_7 = arith.constant 0 : index
    %5 = vector.load %arg6[%c0_5, %c0_6, %c0_7] : memref<1x88x256xf32, #tpu.memory_space<vmem>>, vector<1x88x256xf32>
    %6 = vector.shape_cast %5 : vector<1x88x256xf32> to vector<88x256xf32>
    %7 = vector.shape_cast %4 : vector<88x256xf32> to vector<1x88x256xf32>
    tpu.vector_store %arg6[%c0_5, %c0_6, %c0_7], %7 {strides = array<i32>} : memref<1x88x256xf32, #tpu.memory_space<vmem>>, vector<1x88x256xf32>,
    %cst_8 = arith.constant dense<0.000000e+00> : vector<88xf32>
    %8 = vector.multi_reduction <add>, %4, %cst_8 [1] : vector<88x256xf32> to vector<88xf32>
    %9 = vector.shape_cast %8 : vector<88xf32> to vector<88x1xf32>
    %10 = arith.addf %1, %9 : vector<88x1xf32>
    %cst_9 = arith.constant 1.960000e+02 : f32
    %11 = vector.broadcast %cst_9 : f32 to vector<88x1xf32>
    %12 = arith.divf %10, %11 : vector<88x1xf32>
    %cst_10 = arith.constant 0.000000e+00 : f32
    %13 = vector.broadcast %cst_10 : f32 to vector<88x1xf32>
    %c0_11 = arith.constant 0 : index
    %c0_12 = arith.constant 0 : index
    %c0_13 = arith.constant 0 : index
    %14 = vector.load %arg6[%c0_11, %c0_12, %c0_13] : memref<1x88x256xf32, #tpu.memory_space<vmem>>, vector<1x88x256xf32>
    %15 = vector.shape_cast %14 : vector<1x88x256xf32> to vector<88x256xf32>
    %16 = vector.broadcast %12 : vector<88x1xf32> to vector<88x256xf32>
    %17 = arith.subf %15, %16 : vector<88x256xf32>
    %18 = arith.mulf %17, %17 : vector<88x256xf32>
    %cst_14 = arith.constant dense<0.000000e+00> : vector<88xf32>
    %19 = vector.multi_reduction <add>, %18, %cst_14 [1] : vector<88x256xf32> to vector<88xf32>
    %20 = vector.shape_cast %19 : vector<88xf32> to vector<88x1xf32>
    %21 = arith.addf %13, %20 : vector<88x1xf32>
    %cst_15 = arith.constant 6.000000e+01 : f32
    %22 = vector.broadcast %cst_15 : f32 to vector<88x1xf32>
    %23 = arith.mulf %22, %12 : vector<88x1xf32>
    %24 = arith.mulf %23, %12 : vector<88x1xf32>
    %25 = arith.subf %21, %24 : vector<88x1xf32>
    %cst_16 = arith.constant 1.960000e+02 : f32
    %26 = vector.broadcast %cst_16 : f32 to vector<88x1xf32>
    %27 = arith.divf %25, %26 : vector<88x1xf32>
    %cst_17 = arith.constant 9.99999974E-6 : f32
    %28 = vector.broadcast %cst_17 : f32 to vector<88x1xf32>
    %29 = arith.addf %27, %28 : vector<88x1xf32>
    %30 = math.rsqrt %29 : vector<88x1xf32>
    %c0_18 = arith.constant 0 : index
    %c0_19 = arith.constant 0 : index
    %31 = vector.load %arg3[%c0_18, %c0_19] : memref<88x1xf32, #tpu.memory_space<vmem>>, vector<88x1xf32>
    %32 = arith.mulf %31, %30 : vector<88x1xf32>
    %c0_20 = arith.constant 0 : index
    %c0_21 = arith.constant 0 : index
    %33 = vector.load %arg4[%c0_20, %c0_21] : memref<88x1xf32, #tpu.memory_space<vmem>>, vector<88x1xf32>
    %34 = arith.mulf %12, %32 : vector<88x1xf32>
    %35 = arith.subf %33, %34 : vector<88x1xf32>
    %c0_22 = arith.constant 0 : index
    %c0_23 = arith.constant 0 : index
    %c0_24 = arith.constant 0 : index
    %36 = vector.load %arg6[%c0_22, %c0_23, %c0_24] : memref<1x88x256xf32, #tpu.memory_space<vmem>>, vector<1x88x256xf32>
    %37 = vector.shape_cast %36 : vector<1x88x256xf32> to vector<88x256xf32>
    %38 = vector.broadcast %32 : vector<88x1xf32> to vector<88x256xf32>
    %39 = arith.mulf %37, %38 : vector<88x256xf32>
    %40 = vector.broadcast %35 : vector<88x1xf32> to vector<88x256xf32>
    %41 = arith.addf %39, %40 : vector<88x256xf32>
    %c0_25 = arith.constant 0 : index
    %c0_26 = arith.constant 0 : index
    %c0_27 = arith.constant 0 : index
    %42 = vector.load %arg5[%c0_25, %c0_26, %c0_27] : memref<1x88x256xf32, #tpu.memory_space<vmem>>, vector<1x88x256xf32>
    %43 = vector.shape_cast %42 : vector<1x88x256xf32> to vector<88x256xf32>
    %44 = vector.shape_cast %41 : vector<88x256xf32> to vector<1x88x256xf32>
    tpu.vector_store %arg5[%c0_25, %c0_26, %c0_27], %44 {strides = array<i32>} : memref<1x88x256xf32, #tpu.memory_space<vmem>>, vector<1x88x256xf32>,
    return
  }
  func.func @transform_0(%arg0: i32) -> (i32, i32, i32) {
    %c0_i32 = arith.constant 0 : i32
    %c0_i32_0 = arith.constant 0 : i32
    %c0_i32_1 = arith.constant 0 : i32
    %c0_i32_2 = arith.constant 0 : i32
    return %c0_i32, %c0_i32_0, %c0_i32_1 : i32, i32, i32
  }
  func.func @transform_1(%arg0: i32) -> (i32, i32) {
    %c0_i32 = arith.constant 0 : i32
    %c0_i32_0 = arith.constant 0 : i32
    return %arg0, %c0_i32 : i32, i32
  }
  func.func @transform_2(%arg0: i32) -> (i32, i32) {
    %c0_i32 = arith.constant 0 : i32
    %c0_i32_0 = arith.constant 0 : i32
    return %arg0, %c0_i32 : i32, i32
  }
  func.func @transform_3(%arg0: i32) -> (i32, i32) {
    %c0_i32 = arith.constant 0 : i32
    %c0_i32_0 = arith.constant 0 : i32
    return %arg0, %c0_i32 : i32, i32
  }
  func.func @transform_4(%arg0: i32) -> (i32, i32, i32) {
    %c0_i32 = arith.constant 0 : i32
    %c0_i32_0 = arith.constant 0 : i32
    %c0_i32_1 = arith.constant 0 : i32
    return %c0_i32, %arg0, %c0_i32_0 : i32, i32, i32
  }
}

</mosaic_0001>

<llo_original>
// kernel: tpu_custom_call.1
$region0: #{tpu_custom_call.1}
  #allocation0 [shape = 'u32[]', space=smem, size = 0x4, offset = 0x4, fixed_abs, tag = 'smem constant byte address 0x4 - core index']
  #allocation1 [shape = 'u32[144,128]{1,0:T(1,128)}', space=vmem, size = 0x12000, scoped, tag = 'internal scratch']
  #allocation2 [shape = 'f32[1,88,256]{2,1,0:T(8,128)}', space=vmem, size = 0x16000, scoped, tag = 'scratch operand']
  %s0 = inlined_call_operand.vmem [shape: f32[1,176,256], index: 0, kind: input, shape index: {}]
  %s1 = inlined_call_operand.hbm [shape: f32[176,176], index: 1, kind: input, shape index: {}]
  %s2 = inlined_call_operand.vmem [shape: f32[176,1], index: 2, kind: input, shape index: {}]
  %s3 = inlined_call_operand.vmem [shape: f32[176,1], index: 3, kind: input, shape index: {}]
  %s4 = inlined_call_operand.hbm [shape: f32[1,176,256], index: 4, kind: output, shape index: {}]
  %s5 = sld [smem:[#allocation0]]
  $region53: #{tpu_custom_call.1} parent=0
    _
  %s7 = ssub.s32 1, %s5
  %s8 = scalar_select 0, %s7, %s5
  $region1: #{tpu_custom_call.1} parent=0
    #allocation3 [shape = 'u8[180224]{0}', space=vmem, size = 0x2c000, scoped, tag = 'input window, operand 1']
    #allocation4 [shape = 's32[2]{0}', space=sflag, size = 0x8, scoped, tag = 'scoped memory for tpu_custom_call.1']
    #allocation5 [shape = 's32[2]{0}', space=sflag, size = 0x8, scoped, tag = 'scoped memory for tpu_custom_call.1']
    #allocation6 [shape = 'u8[180224]{0}', space=vmem, size = 0x2c000, scoped, tag = 'output window, operand 0']
    %9 = vsyncpa [#allocation4], 0
    %s10 = scalar_lea.sflag [#allocation4], 1
    %11 = vsyncpa %s10, 0
    %12 = vsyncpa [#allocation5], 0
    %s13 = scalar_lea.sflag [#allocation5], 1
    %14 = vsyncpa %s13, 0
    loop: start=0, step=1, limit=4
    $region2: #{tpu_custom_call.1} parent=1 // loop_pre_header
      _
    $region3: #{tpu_custom_call.1} parent=1 // loop_header
      %s16 = sphi 0, %s20
      %p17 = scmp.ge.s32.totalorder %s16, 4
      %s24 = sphi 0, %s24
      %s26 = sphi 0, %s24
      %s27 = sphi 0, %s26
      %s41 = sphi 0, %s27
      %s47 = sphi 0, %s49
      %s50 = sphi 0, %s47
      %s51 = sphi 0, %s50
      %s67 = sphi 0, %s51
      %s73 = sphi 0, %s75
      %s76 = sphi 0, %s73
      %s77 = sphi 0, %s76
      %s93 = sphi 0, %s77
      %s99 = sphi 0, %s101
      %s102 = sphi 0, %s99
      %s103 = sphi 0, %s102
      %s119 = sphi 0, %s103
      %s125 = sphi 0, %s127
      %s128 = sphi 0, %s125
      %s129 = sphi 0, %s128
      %s145 = sphi 0, %s129
    $region4: #{tpu_custom_call.1} parent=1 // loop_header_branch
      %19 = sbr.rel (%p17) target = $region8
    $region5: #{tpu_custom_call.1} parent=1 // loop_body
      %s21 = ssub.s32 %s16, 1
      %s22 = ssub.s32 %s16, 2
      %s23 = sadd.s32 %s16, 1
      %s25 = sadd.s32 %s24, 1
      %p28 = scmp.eq.s32.totalorder %s16, 1
      %p29 = scmp.ne.s32.totalorder %s24, %s26
      %p30 = scmp.eq.s32.totalorder %s16, 0
      %p31 = por %p29, %p30
      %p32 = scmp.ne.s32.totalorder %s24, %s26
      %p33 = scmp.eq.s32.totalorder %s21, 1
      %p34 = por %p32, %p33
      %p35 = scmp.ne.s32.totalorder %s26, %s27
      %p36 = scmp.eq.s32.totalorder %s21, 0
      %p37 = por %p35, %p36
      %p38 = scmp.ne.s32.totalorder %s26, %s27
      %p39 = scmp.eq.s32.totalorder %s22, 1
      %p40 = por %p38, %p39
      %p42 = scmp.ne.s32.totalorder %s27, %s41
      %p43 = scmp.eq.s32.totalorder %s22, 0
      %p44 = por %p42, %p43
      %s45 = ssub.s32 %s16, %s23
      %p46 = scmp.eq.s32.totalorder %s45, 0
      %s48 = sadd.s32 %s47, 1
      %s49 = scalar_select %p46, %s47, %s48
      %p52 = pneg %p46
      %p53 = scmp.eq.s32.totalorder %s16, 1
      %p54 = por %p52, %p53
      %p55 = scmp.ne.s32.totalorder %s47, %s50
      %p56 = scmp.eq.s32.totalorder %s16, 0
      %p57 = por %p55, %p56
      %p58 = scmp.ne.s32.totalorder %s47, %s50
      %p59 = scmp.eq.s32.totalorder %s21, 1
      %p60 = por %p58, %p59
      %p61 = scmp.ne.s32.totalorder %s50, %s51
      %p62 = scmp.eq.s32.totalorder %s21, 0
      %p63 = por %p61, %p62
      %p64 = scmp.ne.s32.totalorder %s50, %s51
      %p65 = scmp.eq.s32.totalorder %s22, 1
      %p66 = por %p64, %p65
      %p68 = scmp.ne.s32.totalorder %s51, %s67
      %p69 = scmp.eq.s32.totalorder %s22, 0
      %p70 = por %p68, %p69
      %s71 = ssub.s32 %s16, %s23
      %p72 = scmp.eq.s32.totalorder %s71, 0
      %s74 = sadd.s32 %s73, 1
      %s75 = scalar_select %p72, %s73, %s74
      %p78 = pneg %p72
      %p79 = scmp.eq.s32.totalorder %s16, 1
      %p80 = por %p78, %p79
      %p81 = scmp.ne.s32.totalorder %s73, %s76
      %p82 = scmp.eq.s32.totalorder %s16, 0
      %p83 = por %p81, %p82
      %p84 = scmp.ne.s32.totalorder %s73, %s76
      %p85 = scmp.eq.s32.totalorder %s21, 1
      %p86 = por %p84, %p85
      %p87 = scmp.ne.s32.totalorder %s76, %s77
      %p88 = scmp.eq.s32.totalorder %s21, 0
      %p89 = por %p87, %p88
      %p90 = scmp.ne.s32.totalorder %s76, %s77
      %p91 = scmp.eq.s32.totalorder %s22, 1
      %p92 = por %p90, %p91
      %p94 = scmp.ne.s32.totalorder %s77, %s93
      %p95 = scmp.eq.s32.totalorder %s22, 0
      %p96 = por %p94, %p95
      %s97 = ssub.s32 %s16, %s23
      %p98 = scmp.eq.s32.totalorder %s97, 0
      %s100 = sadd.s32 %s99, 1
      %s101 = scalar_select %p98, %s99, %s100
      %p104 = pneg %p98
      %p105 = scmp.eq.s32.totalorder %s16, 1
      %p106 = por %p104, %p105
      %p107 = scmp.ne.s32.totalorder %s99, %s102
      %p108 = scmp.eq.s32.totalorder %s16, 0
      %p109 = por %p107, %p108
      %p110 = scmp.ne.s32.totalorder %s99, %s102
      %p111 = scmp.eq.s32.totalorder %s21, 1
      %p112 = por %p110, %p111
      %p113 = scmp.ne.s32.totalorder %s102, %s103
      %p114 = scmp.eq.s32.totalorder %s21, 0
      %p115 = por %p113, %p114
      %p116 = scmp.ne.s32.totalorder %s102, %s103
      %p117 = scmp.eq.s32.totalorder %s22, 1
      %p118 = por %p116, %p117
      %p120 = scmp.ne.s32.totalorder %s103, %s119
      %p121 = scmp.eq.s32.totalorder %s22, 0
      %p122 = por %p120, %p121
      %s123 = ssub.s32 %s16, %s23
      %p124 = scmp.eq.s32.totalorder %s123, 0
      %s126 = sadd.s32 %s125, 1
      %s127 = scalar_select %p124, %s125, %s126
      %p130 = pneg %p124
      %p131 = scmp.eq.s32.totalorder %s16, 1
      %p132 = por %p130, %p131
      %p133 = scmp.ne.s32.totalorder %s125, %s128
      %p134 = scmp.eq.s32.totalorder %s16, 0
      %p135 = por %p133, %p134
      %p136 = scmp.ne.s32.totalorder %s125, %s128
      %p137 = scmp.eq.s32.totalorder %s21, 1
      %p138 = por %p136, %p137
      %p139 = scmp.ne.s32.totalorder %s128, %s129
      %p140 = scmp.eq.s32.totalorder %s21, 0
      %p141 = por %p139, %p140
      %p142 = scmp.ne.s32.totalorder %s128, %s129
      %p143 = scmp.eq.s32.totalorder %s22, 1
      %p144 = por %p142, %p143
      %p146 = scmp.ne.s32.totalorder %s129, %s145
      %p147 = scmp.eq.s32.totalorder %s22, 0
      %p148 = por %p146, %p147
      %p149 = scmp.le.s32.totalorder 1, %s16
      %p150 = scmp.lt.s32.totalorder %s16, 3
      %p151 = pnand %p149, %p150
      %p152 = pneg %p151
      // Predicated region
      $region9: #{tpu_custom_call.1} parent=5 // pred_check
        _
      $region10: #{tpu_custom_call.1} parent=5 // pred_check_branch
        %154 = sbr.rel (%p151) target = $region12
      $region11: #{tpu_custom_call.1} parent=5 // pred_region
        %s155 = ssub.s32 %s16, 1
        // Predicated region
        $region13: #{tpu_custom_call.1} parent=11 // pred_check
          %p156 = pneg %p37
        $region14: #{tpu_custom_call.1} parent=11 // pred_check_branch
          %158 = sbr.rel (%p156) target = $region16
        $region15: #{tpu_custom_call.1} parent=11 // pred_region
          _
        $region16: #{tpu_custom_call.1} parent=11 // pred_fallthru
          _
      $region12: #{tpu_custom_call.1} parent=5 // pred_fallthru
        _
      %p159 = scmp.lt.s32.totalorder %s16, 2
      // Predicated region
      $region17: #{tpu_custom_call.1} parent=5 // pred_check
        %p160 = pneg %p159
      $region18: #{tpu_custom_call.1} parent=5 // pred_check_branch
        %162 = sbr.rel (%p160) target = $region20
      $region19: #{tpu_custom_call.1} parent=5 // pred_region
        // Predicated region
        $region21: #{tpu_custom_call.1} parent=19 // pred_check
          %p163 = pneg %p57
        $region22: #{tpu_custom_call.1} parent=19 // pred_check_branch
          %165 = sbr.rel (%p163) target = $region24
        $region23: #{tpu_custom_call.1} parent=19 // pred_region
          %s166 = sand.u32 %s47, 1
          %s167 = scalar_lea.sflag [#allocation4], %s166
          %s168 = sand.u32 %s47, 1
          %s169 = smul.addr %s168, 176
          %s170 = scalar_lea.vmem [#allocation3], %s169
          %s171 = smul.u32 11, %s16
          %s173 = ssub.s32 2816, 2816
          %174 = vsyncadd %s167, %s173
          %s175 = smul.addr %s171, 2
          %s176 = smul.addr %s175, 128
          %s177 = scalar_lea.hbm %s1, %s176
          %s178 = sshll.u32 %s170, 4
          %s179 = int_to_ptr.vmem [resolvable:$true] %s178
          %184 = dma.hbm_to_vmem [thread:$0]  %s177, 2816, %s179, %s167, 256, 256, 16
        $region24: #{tpu_custom_call.1} parent=19 // pred_fallthru
          _
        // Predicated region
        $region25: #{tpu_custom_call.1} parent=19 // pred_check
          %p185 = pneg %p83
        $region26: #{tpu_custom_call.1} parent=19 // pred_check_branch
          %187 = sbr.rel (%p185) target = $region28
        $region27: #{tpu_custom_call.1} parent=19 // pred_region
          %s188 = smul.u32 11, %s16
          %p189 = scmp.lt.s32.totalorder %s188, 21
          %s190 = scalar_select %p189, %s188, 21
          %s191 = smul.addr %s190, 8
          %s192 = scalar_lea.vmem %s2, %s191
          %s193 = smul.u32 11, %s16
        $region28: #{tpu_custom_call.1} parent=19 // pred_fallthru
          _
        // Predicated region
        $region29: #{tpu_custom_call.1} parent=19 // pred_check
          %p194 = pneg %p109
        $region30: #{tpu_custom_call.1} parent=19 // pred_check_branch
          %196 = sbr.rel (%p194) target = $region32
        $region31: #{tpu_custom_call.1} parent=19 // pred_region
          %s197 = smul.u32 11, %s16
          %p198 = scmp.lt.s32.totalorder %s197, 21
          %s199 = scalar_select %p198, %s197, 21
          %s200 = smul.addr %s199, 8
          %s201 = scalar_lea.vmem %s3, %s200
          %s202 = smul.u32 11, %s16
        $region32: #{tpu_custom_call.1} parent=19 // pred_fallthru
          _
      $region20: #{tpu_custom_call.1} parent=5 // pred_fallthru
        _
      %p203 = scmp.le.s32.totalorder 1, %s16
      %p204 = scmp.lt.s32.totalorder %s16, 3
      %p205 = pnand %p203, %p204
      %p206 = pneg %p205
      // Predicated region
      $region33: #{tpu_custom_call.1} parent=5 // pred_check
        _
      $region34: #{tpu_custom_call.1} parent=5 // pred_check_branch
        %208 = sbr.rel (%p205) target = $region36
      $region35: #{tpu_custom_call.1} parent=5 // pred_region
        %s209 = ssub.s32 %s16, 1
        %s210 = sand.u32 %s50, 1
        %s211 = scalar_lea.sflag [#allocation4], %s210
        %s212 = sand.u32 %s50, 1
        %s213 = smul.addr %s212, 176
        %s214 = scalar_lea.vmem [#allocation3], %s213
        // Predicated region
        $region37: #{tpu_custom_call.1} parent=35 // pred_check
          %p215 = pneg %p63
        $region38: #{tpu_custom_call.1} parent=35 // pred_check_branch
          %217 = sbr.rel (%p215) target = $region40
        $region39: #{tpu_custom_call.1} parent=35 // pred_region
          %218 = dma.done %s211, 2816
        $region40: #{tpu_custom_call.1} parent=35 // pred_fallthru
          _
        %p219 = pneg %p37
        %p220 = pneg %p34
        %s221 = sand.u32 %s50, 1
        %s222 = scalar_lea.sflag [#allocation4], %s221
        %s223 = sand.u32 %s50, 1
        %s224 = smul.addr %s223, 176
        %s225 = scalar_lea.vmem [#allocation3], %s224
        %p226 = pneg %p63
        %p227 = pneg %p60
        %s228 = smul.u32 11, %s21
        %p229 = scmp.lt.s32.totalorder %s228, 21
        %s230 = scalar_select %p229, %s228, 21
        %s231 = smul.addr %s230, 8
        %s232 = scalar_lea.vmem %s2, %s231
        %p233 = pneg %p89
        %p234 = pneg %p86
        %s235 = smul.u32 11, %s21
        %p236 = scmp.lt.s32.totalorder %s235, 21
        %s237 = scalar_select %p236, %s235, 21
        %s238 = smul.addr %s237, 8
        %s239 = scalar_lea.vmem %s3, %s238
        %p240 = pneg %p115
        %p241 = pneg %p112
        %p242 = pneg %p141
        %p243 = pneg %p138
        %s244 = sand.u32 %s128, 1
        %s245 = scalar_lea.sflag [#allocation5], %s244
        %s246 = sand.u32 %s128, 1
        %s247 = smul.addr %s246, 176
        %s248 = scalar_lea.vmem [#allocation6], %s247
        %s249 = smul.u32 11, %s21
        %s250 = smul.u32 11, %s21
        %p251 = scmp.lt.s32.totalorder %s250, 21
        %s252 = scalar_select %p251, %s250, 21
        %s253 = smul.addr %s252, 8
        %s254 = scalar_lea.vmem %s2, %s253
        %s255 = smul.u32 11, %s21
        %s256 = smul.u32 11, %s21
        %p257 = scmp.lt.s32.totalorder %s256, 21
        %s258 = scalar_select %p257, %s256, 21
        %s259 = smul.addr %s258, 8
        %s260 = scalar_lea.vmem %s3, %s259
        %s261 = smul.u32 11, %s21
        %s262 = smul.u32 11, %s21
        %v263 = vld [vmem:[%s214] sm:$0xff]
        %v264 = vld [vmem:[%s214 + $0x8] sm:$0xff]
        %v265 = vld [vmem:[%s214 + $0x10] sm:$0xff]
        %v266 = vld [vmem:[%s214 + $0x18] sm:$0xff]
        %v267 = vld [vmem:[%s214 + $0x20] sm:$0xff]
        %v268 = vld [vmem:[%s214 + $0x28] sm:$0xff]
        %v269 = vld [vmem:[%s214 + $0x30] sm:$0xff]
        %v270 = vld [vmem:[%s214 + $0x38] sm:$0xff]
        %v271 = vld [vmem:[%s214 + $0x40] sm:$0xff]
        %v272 = vld [vmem:[%s214 + $0x48] sm:$0xff]
        %v273 = vld [vmem:[%s214 + $0x50] sm:$0xff]
        %v274 = vld [vmem:[%s214 + $0x58] sm:$0xff]
        %v275 = vld [vmem:[%s214 + $0x60] sm:$0xff]
        %v276 = vld [vmem:[%s214 + $0x68] sm:$0xff]
        %v277 = vld [vmem:[%s214 + $0x70] sm:$0xff]
        %v278 = vld [vmem:[%s214 + $0x78] sm:$0xff]
        %v279 = vld [vmem:[%s214 + $0x80] sm:$0xff]
        %v280 = vld [vmem:[%s214 + $0x88] sm:$0xff]
        %v281 = vld [vmem:[%s214 + $0x90] sm:$0xff]
        %v282 = vld [vmem:[%s214 + $0x98] sm:$0xff]
        %v283 = vld [vmem:[%s214 + $0xa0] sm:$0xff]
        %v284 = vld [vmem:[%s214 + $0xa8] sm:$0xff]
        %v285 = vld [vmem:[%s0] sm:$0xff]
        %v286 = vld [vmem:[%s0 + $0x8] sm:$0xff]
        %v287 = vld [vmem:[%s0 + $0x10] sm:$0xff]
        %v288 = vld [vmem:[%s0 + $0x18] sm:$0xff]
        %v289 = vld [vmem:[%s0 + $0x20] sm:$0xff]
        %v290 = vld [vmem:[%s0 + $0x28] sm:$0xff]
        %v291 = vld [vmem:[%s0 + $0x30] sm:$0xff]
        %v292 = vld [vmem:[%s0 + $0x38] sm:$0xff]
        %v293 = vld [vmem:[%s0 + $0x40] sm:$0xff]
        %v294 = vld [vmem:[%s0 + $0x48] sm:$0xff]
        %v295 = vld [vmem:[%s0 + $0x50] sm:$0xff]
        %v296 = vld [vmem:[%s0 + $0x58] sm:$0xff]
        %v297 = vld [vmem:[%s0 + $0x60] sm:$0xff]
        %v298 = vld [vmem:[%s0 + $0x68] sm:$0xff]
        %v299 = vld [vmem:[%s0 + $0x70] sm:$0xff]
        %v300 = vld [vmem:[%s0 + $0x78] sm:$0xff]
        %v301 = vld [vmem:[%s0 + $0x80] sm:$0xff]
        %v302 = vld [vmem:[%s0 + $0x88] sm:$0xff]
        %v303 = vld [vmem:[%s0 + $0x90] sm:$0xff]
        %v304 = vld [vmem:[%s0 + $0x98] sm:$0xff]
        %v305 = vld [vmem:[%s0 + $0xa0] sm:$0xff]
        %v306 = vld [vmem:[%s0 + $0xa8] sm:$0xff]
        %v307 = vld [vmem:[%s0 + $0xb0] sm:$0xff]
        %v308 = vld [vmem:[%s0 + $0xb8] sm:$0xff]
        %v309 = vld [vmem:[%s0 + $0xc0] sm:$0xff]
        %v310 = vld [vmem:[%s0 + $0xc8] sm:$0xff]
        %v311 = vld [vmem:[%s0 + $0xd0] sm:$0xff]
        %v312 = vld [vmem:[%s0 + $0xd8] sm:$0xff]
        %v313 = vld [vmem:[%s0 + $0xe0] sm:$0xff]
        %v314 = vld [vmem:[%s0 + $0xe8] sm:$0xff]
        %v315 = vld [vmem:[%s0 + $0xf0] sm:$0xff]
        %v316 = vld [vmem:[%s0 + $0xf8] sm:$0xff]
        %v317 = vld [vmem:[%s0 + $0x100] sm:$0xff]
        %v318 = vld [vmem:[%s0 + $0x108] sm:$0xff]
        %v319 = vld [vmem:[%s0 + $0x110] sm:$0xff]
        %v320 = vld [vmem:[%s0 + $0x118] sm:$0xff]
        %v321 = vld [vmem:[%s0 + $0x120] sm:$0xff]
        %v322 = vld [vmem:[%s0 + $0x128] sm:$0xff]
        %v323 = vld [vmem:[%s0 + $0x130] sm:$0xff]
        %v324 = vld [vmem:[%s0 + $0x138] sm:$0xff]
        %v325 = vld [vmem:[%s0 + $0x140] sm:$0xff]
        %v326 = vld [vmem:[%s0 + $0x148] sm:$0xff]
        %v327 = vld [vmem:[%s0 + $0x150] sm:$0xff]
        %v328 = vld [vmem:[%s0 + $0x158] sm:$0xff]
        %vm329 = vcmask 392192
        %v331 = vsel %vm329, %v264, 0
        %v334 = vsel %vm329, %v266, 0
        %v337 = vsel %vm329, %v268, 0
        %v340 = vsel %vm329, %v270, 0
        %v343 = vsel %vm329, %v272, 0
        %v346 = vsel %vm329, %v274, 0
        %v349 = vsel %vm329, %v276, 0
        %v352 = vsel %vm329, %v278, 0
        %v355 = vsel %vm329, %v280, 0
        %v358 = vsel %vm329, %v282, 0
        %v361 = vsel %vm329, %v284, 0
        %363 = vmatprep.subr.mxu0 %v316
        %364 = vmatpush1.msra.mxu0 %v315
        %365 = vmatprep.subr.mxu0 %v314
        %366 = vmatpush1.msra.mxu0 %v313
        %367 = vmatprep.subr.mxu0 %v312
        %368 = vmatpush1.msra.mxu0 %v311
        %369 = vmatprep.subr.mxu0 %v310
        %370 = vmatpush1.msra.mxu0 %v309
        %371 = vmatprep.subr.mxu0 %v308
        %372 = vmatpush1.msra.mxu0 %v307
        %373 = vmatprep.subr.mxu0 %v306
        %374 = vmatpush1.msra.mxu0 %v305
        %375 = vmatprep.subr.mxu0 %v304
        %376 = vmatpush1.msra.mxu0 %v303
        %377 = vmatprep.subr.mxu0 %v302
        %378 = vmatpush1.msra.mxu0 %v301
        %379 = vmatprep.subr.mxu0 %v300
        %380 = vmatpush1.msra.mxu0 %v299
        %381 = vmatprep.subr.mxu0 %v298
        %382 = vmatpush1.msra.mxu0 %v297
        %383 = vmatprep.subr.mxu0 %v296
        %384 = vmatpush1.msra.mxu0 %v295
        %385 = vmatprep.subr.mxu0 %v294
        %386 = vmatpush1.msra.mxu0 %v293
        %387 = vmatprep.subr.mxu0 %v292
        %388 = vmatpush1.msra.mxu0 %v291
        %389 = vmatprep.subr.mxu0 %v290
        %390 = vmatpush1.msra.mxu0 %v289
        %391 = vmatprep.subr.mxu0 %v288
        %392 = vmatpush1.msra.mxu0 %v287
        %393 = vmatprep.subr.mxu0 %v286
        %394 = vmatpush1.msra.mxu0 %v285
        %395 = vmatprep.subr.mxu0 0.0
        %396 = vmatpush2.msra.mxu0 0.0
        %397 = vmatprep.subr.mxu0 0.0
        %398 = vmatpush2.msra.mxu0 0.0
        %399 = vmatprep.subr.mxu0 0.0
        %400 = vmatpush2.msra.mxu0 0.0
        %401 = vmatprep.subr.mxu0 0.0
        %402 = vmatpush2.msra.mxu0 0.0
        %403 = vmatprep.subr.mxu0 0.0
        %404 = vmatpush2.msra.mxu0 0.0
        %405 = vmatprep.subr.mxu0 0.0
        %406 = vmatpush2.msra.mxu0 0.0
        %407 = vmatprep.subr.mxu0 0.0
        %408 = vmatpush2.msra.mxu0 0.0
        %409 = vmatprep.subr.mxu0 0.0
        %410 = vmatpush2.msra.mxu0 0.0
        %411 = vmatprep.subr.mxu0 0.0
        %412 = vmatpush2.msra.mxu0 0.0
        %413 = vmatprep.subr.mxu0 0.0
        %414 = vmatpush2.msra.mxu0 0.0
        %415 = vmatprep.subr.mxu0 %v328
        %416 = vmatpush2.msra.mxu0 %v327
        %417 = vmatprep.subr.mxu0 %v326
        %418 = vmatpush2.msra.mxu0 %v325
        %419 = vmatprep.subr.mxu0 %v324
        %420 = vmatpush2.msra.mxu0 %v323
        %421 = vmatprep.subr.mxu0 %v322
        %422 = vmatpush2.msra.mxu0 %v321
        %423 = vmatprep.subr.mxu0 %v320
        %424 = vmatpush2.msra.mxu0 %v319
        %425 = vmatprep.subr.mxu0 %v318
        %426 = vmatpush2.msra.mxu0 %v317
        %427 = vmatprep.mubr.f32.mxu0 %v331
        %428 = vmatmul.mubr.f32.gmra.mxu0 %v263
        %v429 = vpop.f32.mrf.mxu0
        %v430 = vadd.f32 0.0, %v429
        %v431 = vpop.f32.mrf.mxu0
        %v432 = vadd.f32 0.0, %v431
        %433 = vmatprep.mubr.f32.mxu0 %v334
        %434 = vmatmul.mubr.f32.gmra.mxu0 %v265
        %v435 = vpop.f32.mrf.mxu0
        %v436 = vadd.f32 0.0, %v435
        %v437 = vpop.f32.mrf.mxu0
        %v438 = vadd.f32 0.0, %v437
        %439 = vmatprep.mubr.f32.mxu0 %v337
        %440 = vmatmul.mubr.f32.gmra.mxu0 %v267
        %v441 = vpop.f32.mrf.mxu0
        %v442 = vadd.f32 0.0, %v441
        %v443 = vpop.f32.mrf.mxu0
        %v444 = vadd.f32 0.0, %v443
        %445 = vmatprep.mubr.f32.mxu0 %v340
        %446 = vmatmul.mubr.f32.gmra.mxu0 %v269
        %v447 = vpop.f32.mrf.mxu0
        %v448 = vadd.f32 0.0, %v447
        %v449 = vpop.f32.mrf.mxu0
        %v450 = vadd.f32 0.0, %v449
        %451 = vmatprep.mubr.f32.mxu0 %v343
        %452 = vmatmul.mubr.f32.gmra.mxu0 %v271
        %v453 = vpop.f32.mrf.mxu0
        %v454 = vadd.f32 0.0, %v453
        %v455 = vpop.f32.mrf.mxu0
        %v456 = vadd.f32 0.0, %v455
        %457 = vmatprep.mubr.f32.mxu0 %v346
        %458 = vmatmul.mubr.f32.gmra.mxu0 %v273
        %v459 = vpop.f32.mrf.mxu0
        %v460 = vadd.f32 0.0, %v459
        %v461 = vpop.f32.mrf.mxu0
        %v462 = vadd.f32 0.0, %v461
        %463 = vmatprep.mubr.f32.mxu0 %v349
        %464 = vmatmul.mubr.f32.gmra.mxu0 %v275
        %v465 = vpop.f32.mrf.mxu0
        %v466 = vadd.f32 0.0, %v465
        %v467 = vpop.f32.mrf.mxu0
        %v468 = vadd.f32 0.0, %v467
        %469 = vmatprep.mubr.f32.mxu0 %v352
        %470 = vmatmul.mubr.f32.gmra.mxu0 %v277
        %v471 = vpop.f32.mrf.mxu0
        %v472 = vadd.f32 0.0, %v471
        %v473 = vpop.f32.mrf.mxu0
        %v474 = vadd.f32 0.0, %v473
        %475 = vmatprep.mubr.f32.mxu0 %v355
        %476 = vmatmul.mubr.f32.gmra.mxu0 %v279
        %v477 = vpop.f32.mrf.mxu0
        %v478 = vadd.f32 0.0, %v477
        %v479 = vpop.f32.mrf.mxu0
        %v480 = vadd.f32 0.0, %v479
        %481 = vmatprep.mubr.f32.mxu0 %v358
        %482 = vmatmul.mubr.f32.gmra.mxu0 %v281
        %v483 = vpop.f32.mrf.mxu0
        %v484 = vadd.f32 0.0, %v483
        %v485 = vpop.f32.mrf.mxu0
        %v486 = vadd.f32 0.0, %v485
        %487 = vmatprep.mubr.f32.mxu0 %v361
        %488 = vmatmul.mubr.f32.gmra.mxu0 %v283
        %v489 = vpop.f32.mrf.mxu0
        %v490 = vadd.f32 0.0, %v489
        %v491 = vpop.f32.mrf.mxu0
        %v492 = vadd.f32 0.0, %v491
        %493 = vdwg.mxu0
        %494 = vst [vmem:[#allocation2] sm:$0xff] %v430
        %495 = vst [vmem:[#allocation2 + $0x8] sm:$0xff] %v432
        %496 = vst [vmem:[#allocation2 + $0x10] sm:$0xff] %v436
        %497 = vst [vmem:[#allocation2 + $0x18] sm:$0xff] %v438
        %498 = vst [vmem:[#allocation2 + $0x20] sm:$0xff] %v442
        %499 = vst [vmem:[#allocation2 + $0x28] sm:$0xff] %v444
        %500 = vst [vmem:[#allocation2 + $0x30] sm:$0xff] %v448
        %501 = vst [vmem:[#allocation2 + $0x38] sm:$0xff] %v450
        %502 = vst [vmem:[#allocation2 + $0x40] sm:$0xff] %v454
        %503 = vst [vmem:[#allocation2 + $0x48] sm:$0xff] %v456
        %504 = vst [vmem:[#allocation2 + $0x50] sm:$0xff] %v460
        %505 = vst [vmem:[#allocation2 + $0x58] sm:$0xff] %v462
        %506 = vst [vmem:[#allocation2 + $0x60] sm:$0xff] %v466
        %507 = vst [vmem:[#allocation2 + $0x68] sm:$0xff] %v468
        %508 = vst [vmem:[#allocation2 + $0x70] sm:$0xff] %v472
        %509 = vst [vmem:[#allocation2 + $0x78] sm:$0xff] %v474
        %510 = vst [vmem:[#allocation2 + $0x80] sm:$0xff] %v478
        %511 = vst [vmem:[#allocation2 + $0x88] sm:$0xff] %v480
        %512 = vst [vmem:[#allocation2 + $0x90] sm:$0xff] %v484
        %513 = vst [vmem:[#allocation2 + $0x98] sm:$0xff] %v486
        %514 = vst [vmem:[#allocation2 + $0xa0] sm:$0xff] %v490
        %515 = vst [vmem:[#allocation2 + $0xa8] sm:$0xff] %v492
        %v516 = vadd.f32 %v430, %v432
        %517 = vadd.xlane.f32.xlu0 %v516
        %v518 = vpop.xlane.xlu0 %517
        %v519 = vadd.f32 %v436, %v438
        %520 = vadd.xlane.f32.xlu0 %v519
        %v521 = vpop.xlane.xlu0 %520
        %v522 = vadd.f32 %v442, %v444
        %523 = vadd.xlane.f32.xlu0 %v522
        %v524 = vpop.xlane.xlu0 %523
        %v525 = vadd.f32 %v448, %v450
        %526 = vadd.xlane.f32.xlu0 %v525
        %v527 = vpop.xlane.xlu0 %526
        %v528 = vadd.f32 %v454, %v456
        %529 = vadd.xlane.f32.xlu0 %v528
        %v530 = vpop.xlane.xlu0 %529
        %v531 = vadd.f32 %v460, %v462
        %532 = vadd.xlane.f32.xlu0 %v531
        %v533 = vpop.xlane.xlu0 %532
        %v534 = vadd.f32 %v466, %v468
        %535 = vadd.xlane.f32.xlu0 %v534
        %v536 = vpop.xlane.xlu0 %535
        %v537 = vadd.f32 %v472, %v474
        %538 = vadd.xlane.f32.xlu0 %v537
        %v539 = vpop.xlane.xlu0 %538
        %v540 = vadd.f32 %v478, %v480
        %541 = vadd.xlane.f32.xlu0 %v540
        %v542 = vpop.xlane.xlu0 %541
        %v543 = vadd.f32 %v484, %v486
        %544 = vadd.xlane.f32.xlu0 %v543
        %v545 = vpop.xlane.xlu0 %544
        %v546 = vadd.f32 %v490, %v492
        %547 = vadd.xlane.f32.xlu0 %v546
        %v548 = vpop.xlane.xlu0 %547
        %v549 = vadd.f32 %v518, 0.0
        %v550 = vadd.f32 %v521, 0.0
        %v551 = vadd.f32 %v524, 0.0
        %v552 = vadd.f32 %v527, 0.0
        %v553 = vadd.f32 %v530, 0.0
        %v554 = vadd.f32 %v533, 0.0
        %v555 = vadd.f32 %v536, 0.0
        %v556 = vadd.f32 %v539, 0.0
        %v557 = vadd.f32 %v542, 0.0
        %v558 = vadd.f32 %v545, 0.0
        %v559 = vadd.f32 %v548, 0.0
        %v560 = vrcp.pop 196.0
        %v561 = vmul.f32 %v549, %v560
        %v562 = vmul.f32 %v550, %v560
        %v563 = vmul.f32 %v551, %v560
        %v564 = vmul.f32 %v552, %v560
        %v565 = vmul.f32 %v553, %v560
        %v566 = vmul.f32 %v554, %v560
        %v567 = vmul.f32 %v555, %v560
        %v568 = vmul.f32 %v556, %v560
        %v569 = vmul.f32 %v557, %v560
        %v570 = vmul.f32 %v558, %v560
        %v571 = vmul.f32 %v559, %v560
        %v572 = vld [vmem:[#allocation2] sm:$0xff]
        %v573 = vld [vmem:[#allocation2 + $0x8] sm:$0xff]
        %v574 = vld [vmem:[#allocation2 + $0x10] sm:$0xff]
        %v575 = vld [vmem:[#allocation2 + $0x18] sm:$0xff]
        %v576 = vld [vmem:[#allocation2 + $0x20] sm:$0xff]
        %v577 = vld [vmem:[#allocation2 + $0x28] sm:$0xff]
        %v578 = vld [vmem:[#allocation2 + $0x30] sm:$0xff]
        %v579 = vld [vmem:[#allocation2 + $0x38] sm:$0xff]
        %v580 = vld [vmem:[#allocation2 + $0x40] sm:$0xff]
        %v581 = vld [vmem:[#allocation2 + $0x48] sm:$0xff]
        %v582 = vld [vmem:[#allocation2 + $0x50] sm:$0xff]
        %v583 = vld [vmem:[#allocation2 + $0x58] sm:$0xff]
        %v584 = vld [vmem:[#allocation2 + $0x60] sm:$0xff]
        %v585 = vld [vmem:[#allocation2 + $0x68] sm:$0xff]
        %v586 = vld [vmem:[#allocation2 + $0x70] sm:$0xff]
        %v587 = vld [vmem:[#allocation2 + $0x78] sm:$0xff]
        %v588 = vld [vmem:[#allocation2 + $0x80] sm:$0xff]
        %v589 = vld [vmem:[#allocation2 + $0x88] sm:$0xff]
        %v590 = vld [vmem:[#allocation2 + $0x90] sm:$0xff]
        %v591 = vld [vmem:[#allocation2 + $0x98] sm:$0xff]
        %v592 = vld [vmem:[#allocation2 + $0xa0] sm:$0xff]
        %v593 = vld [vmem:[#allocation2 + $0xa8] sm:$0xff]
        %v594 = vsub.f32 %v572, %v561
        %v595 = vsub.f32 %v573, %v561
        %v596 = vsub.f32 %v574, %v562
        %v597 = vsub.f32 %v575, %v562
        %v598 = vsub.f32 %v576, %v563
        %v599 = vsub.f32 %v577, %v563
        %v600 = vsub.f32 %v578, %v564
        %v601 = vsub.f32 %v579, %v564
        %v602 = vsub.f32 %v580, %v565
        %v603 = vsub.f32 %v581, %v565
        %v604 = vsub.f32 %v582, %v566
        %v605 = vsub.f32 %v583, %v566
        %v606 = vsub.f32 %v584, %v567
        %v607 = vsub.f32 %v585, %v567
        %v608 = vsub.f32 %v586, %v568
        %v609 = vsub.f32 %v587, %v568
        %v610 = vsub.f32 %v588, %v569
        %v611 = vsub.f32 %v589, %v569
        %v612 = vsub.f32 %v590, %v570
        %v613 = vsub.f32 %v591, %v570
        %v614 = vsub.f32 %v592, %v571
        %v615 = vsub.f32 %v593, %v571
        %v616 = vmul.f32 %v594, %v594
        %v617 = vmul.f32 %v595, %v595
        %v618 = vmul.f32 %v596, %v596
        %v619 = vmul.f32 %v597, %v597
        %v620 = vmul.f32 %v598, %v598
        %v621 = vmul.f32 %v599, %v599
        %v622 = vmul.f32 %v600, %v600
        %v623 = vmul.f32 %v601, %v601
        %v624 = vmul.f32 %v602, %v602
        %v625 = vmul.f32 %v603, %v603
        %v626 = vmul.f32 %v604, %v604
        %v627 = vmul.f32 %v605, %v605
        %v628 = vmul.f32 %v606, %v606
        %v629 = vmul.f32 %v607, %v607
        %v630 = vmul.f32 %v608, %v608
        %v631 = vmul.f32 %v609, %v609
        %v632 = vmul.f32 %v610, %v610
        %v633 = vmul.f32 %v611, %v611
        %v634 = vmul.f32 %v612, %v612
        %v635 = vmul.f32 %v613, %v613
        %v636 = vmul.f32 %v614, %v614
        %v637 = vmul.f32 %v615, %v615
        %v638 = vadd.f32 %v616, %v617
        %639 = vadd.xlane.f32.xlu0 %v638
        %v640 = vpop.xlane.xlu0 %639
        %v641 = vadd.f32 %v618, %v619
        %642 = vadd.xlane.f32.xlu0 %v641
        %v643 = vpop.xlane.xlu0 %642
        %v644 = vadd.f32 %v620, %v621
        %645 = vadd.xlane.f32.xlu0 %v644
        %v646 = vpop.xlane.xlu0 %645
        %v647 = vadd.f32 %v622, %v623
        %648 = vadd.xlane.f32.xlu0 %v647
        %v649 = vpop.xlane.xlu0 %648
        %v650 = vadd.f32 %v624, %v625
        %651 = vadd.xlane.f32.xlu0 %v650
        %v652 = vpop.xlane.xlu0 %651
        %v653 = vadd.f32 %v626, %v627
        %654 = vadd.xlane.f32.xlu0 %v653
        %v655 = vpop.xlane.xlu0 %654
        %v656 = vadd.f32 %v628, %v629
        %657 = vadd.xlane.f32.xlu0 %v656
        %v658 = vpop.xlane.xlu0 %657
        %v659 = vadd.f32 %v630, %v631
        %660 = vadd.xlane.f32.xlu0 %v659
        %v661 = vpop.xlane.xlu0 %660
        %v662 = vadd.f32 %v632, %v633
        %663 = vadd.xlane.f32.xlu0 %v662
        %v664 = vpop.xlane.xlu0 %663
        %v665 = vadd.f32 %v634, %v635
        %666 = vadd.xlane.f32.xlu0 %v665
        %v667 = vpop.xlane.xlu0 %666
        %v668 = vadd.f32 %v636, %v637
        %669 = vadd.xlane.f32.xlu0 %v668
        %v670 = vpop.xlane.xlu0 %669
        %v671 = vadd.f32 %v640, 0.0
        %v672 = vadd.f32 %v643, 0.0
        %v673 = vadd.f32 %v646, 0.0
        %v674 = vadd.f32 %v649, 0.0
        %v675 = vadd.f32 %v652, 0.0
        %v676 = vadd.f32 %v655, 0.0
        %v677 = vadd.f32 %v658, 0.0
        %v678 = vadd.f32 %v661, 0.0
        %v679 = vadd.f32 %v664, 0.0
        %v680 = vadd.f32 %v667, 0.0
        %v681 = vadd.f32 %v670, 0.0
        %v682 = vmul.f32 %v561, 60.0
        %v683 = vmul.f32 %v562, 60.0
        %v684 = vmul.f32 %v563, 60.0
        %v685 = vmul.f32 %v564, 60.0
        %v686 = vmul.f32 %v565, 60.0
        %v687 = vmul.f32 %v566, 60.0
        %v688 = vmul.f32 %v567, 60.0
        %v689 = vmul.f32 %v568, 60.0
        %v690 = vmul.f32 %v569, 60.0
        %v691 = vmul.f32 %v570, 60.0
        %v692 = vmul.f32 %v571, 60.0
        %v693 = vmul.f32 %v682, %v561
        %v694 = vmul.f32 %v683, %v562
        %v695 = vmul.f32 %v684, %v563
        %v696 = vmul.f32 %v685, %v564
        %v697 = vmul.f32 %v686, %v565
        %v698 = vmul.f32 %v687, %v566
        %v699 = vmul.f32 %v688, %v567
        %v700 = vmul.f32 %v689, %v568
        %v701 = vmul.f32 %v690, %v569
        %v702 = vmul.f32 %v691, %v570
        %v703 = vmul.f32 %v692, %v571
        %v704 = vsub.f32 %v671, %v693
        %v705 = vsub.f32 %v672, %v694
        %v706 = vsub.f32 %v673, %v695
        %v707 = vsub.f32 %v674, %v696
        %v708 = vsub.f32 %v675, %v697
        %v709 = vsub.f32 %v676, %v698
        %v710 = vsub.f32 %v677, %v699
        %v711 = vsub.f32 %v678, %v700
        %v712 = vsub.f32 %v679, %v701
        %v713 = vsub.f32 %v680, %v702
        %v714 = vsub.f32 %v681, %v703
        %v715 = vmul.f32 %v704, %v560
        %v716 = vmul.f32 %v705, %v560
        %v717 = vmul.f32 %v706, %v560
        %v718 = vmul.f32 %v707, %v560
        %v719 = vmul.f32 %v708, %v560
        %v720 = vmul.f32 %v709, %v560
        %v721 = vmul.f32 %v710, %v560
        %v722 = vmul.f32 %v711, %v560
        %v723 = vmul.f32 %v712, %v560
        %v724 = vmul.f32 %v713, %v560
        %v725 = vmul.f32 %v714, %v560
        %v726 = vadd.f32 %v715, 1e-05
        %v727 = vadd.f32 %v716, 1e-05
        %v728 = vadd.f32 %v717, 1e-05
        %v729 = vadd.f32 %v718, 1e-05
        %v730 = vadd.f32 %v719, 1e-05
        %v731 = vadd.f32 %v720, 1e-05
        %v732 = vadd.f32 %v721, 1e-05
        %v733 = vadd.f32 %v722, 1e-05
        %v734 = vadd.f32 %v723, 1e-05
        %v735 = vadd.f32 %v724, 1e-05
        %v736 = vadd.f32 %v725, 1e-05
        %v737 = vrsqrt.pop %v726
        %v738 = vrsqrt.pop %v727
        %v739 = vrsqrt.pop %v728
        %v740 = vrsqrt.pop %v729
        %v741 = vrsqrt.pop %v730
        %v742 = vrsqrt.pop %v731
        %v743 = vrsqrt.pop %v732
        %v744 = vrsqrt.pop %v733
        %v745 = vrsqrt.pop %v734
        %v746 = vrsqrt.pop %v735
        %v747 = vrsqrt.pop %v736
        %v748 = vld [vmem:[%s254] sm:$0xff]
        %v749 = vld [vmem:[%s254 + $0x8] sm:$0xff]
        %v750 = vld [vmem:[%s254 + $0x10] sm:$0xff]
        %v751 = vld [vmem:[%s254 + $0x18] sm:$0xff]
        %v752 = vld [vmem:[%s254 + $0x20] sm:$0xff]
        %v753 = vld [vmem:[%s254 + $0x28] sm:$0xff]
        %v754 = vld [vmem:[%s254 + $0x30] sm:$0xff]
        %v755 = vld [vmem:[%s254 + $0x38] sm:$0xff]
        %v756 = vld [vmem:[%s254 + $0x40] sm:$0xff]
        %v757 = vld [vmem:[%s254 + $0x48] sm:$0xff]
        %v758 = vld [vmem:[%s254 + $0x50] sm:$0xff]
        %v759 = vmul.f32 %v748, %v737
        %v760 = vmul.f32 %v749, %v738
        %v761 = vmul.f32 %v750, %v739
        %v762 = vmul.f32 %v751, %v740
        %v763 = vmul.f32 %v752, %v741
        %v764 = vmul.f32 %v753, %v742
        %v765 = vmul.f32 %v754, %v743
        %v766 = vmul.f32 %v755, %v744
        %v767 = vmul.f32 %v756, %v745
        %v768 = vmul.f32 %v757, %v746
        %v769 = vmul.f32 %v758, %v747
        %v770 = vld [vmem:[%s260] sm:$0xff]
        %v771 = vld [vmem:[%s260 + $0x8] sm:$0xff]
        %v772 = vld [vmem:[%s260 + $0x10] sm:$0xff]
        %v773 = vld [vmem:[%s260 + $0x18] sm:$0xff]
        %v774 = vld [vmem:[%s260 + $0x20] sm:$0xff]
        %v775 = vld [vmem:[%s260 + $0x28] sm:$0xff]
        %v776 = vld [vmem:[%s260 + $0x30] sm:$0xff]
        %v777 = vld [vmem:[%s260 + $0x38] sm:$0xff]
        %v778 = vld [vmem:[%s260 + $0x40] sm:$0xff]
        %v779 = vld [vmem:[%s260 + $0x48] sm:$0xff]
        %v780 = vld [vmem:[%s260 + $0x50] sm:$0xff]
        %v781 = vmul.f32 %v561, %v759
        %v782 = vmul.f32 %v562, %v760
        %v783 = vmul.f32 %v563, %v761
        %v784 = vmul.f32 %v564, %v762
        %v785 = vmul.f32 %v565, %v763
        %v786 = vmul.f32 %v566, %v764
        %v787 = vmul.f32 %v567, %v765
        %v788 = vmul.f32 %v568, %v766
        %v789 = vmul.f32 %v569, %v767
        %v790 = vmul.f32 %v570, %v768
        %v791 = vmul.f32 %v571, %v769
        %v792 = vsub.f32 %v770, %v781
        %v793 = vsub.f32 %v771, %v782
        %v794 = vsub.f32 %v772, %v783
        %v795 = vsub.f32 %v773, %v784
        %v796 = vsub.f32 %v774, %v785
        %v797 = vsub.f32 %v775, %v786
        %v798 = vsub.f32 %v776, %v787
        %v799 = vsub.f32 %v777, %v788
        %v800 = vsub.f32 %v778, %v789
        %v801 = vsub.f32 %v779, %v790
        %v802 = vsub.f32 %v780, %v791
        %804 = vset.pattern.permute.xlu0 0
        %805 = vperm.xlu0 %804, %v759
        %v806 = vpop.permute.xlu0 %805
        %809 = vset.pattern.permute.xlu0 0
        %810 = vperm.xlu0 %809, %v760
        %v811 = vpop.permute.xlu0 %810
        %814 = vset.pattern.permute.xlu0 0
        %815 = vperm.xlu0 %814, %v761
        %v816 = vpop.permute.xlu0 %815
        %819 = vset.pattern.permute.xlu0 0
        %820 = vperm.xlu0 %819, %v762
        %v821 = vpop.permute.xlu0 %820
        %824 = vset.pattern.permute.xlu0 0
        %825 = vperm.xlu0 %824, %v763
        %v826 = vpop.permute.xlu0 %825
        %829 = vset.pattern.permute.xlu0 0
        %830 = vperm.xlu0 %829, %v764
        %v831 = vpop.permute.xlu0 %830
        %834 = vset.pattern.permute.xlu0 0
        %835 = vperm.xlu0 %834, %v765
        %v836 = vpop.permute.xlu0 %835
        %839 = vset.pattern.permute.xlu0 0
        %840 = vperm.xlu0 %839, %v766
        %v841 = vpop.permute.xlu0 %840
        %844 = vset.pattern.permute.xlu0 0
        %845 = vperm.xlu0 %844, %v767
        %v846 = vpop.permute.xlu0 %845
        %849 = vset.pattern.permute.xlu0 0
        %850 = vperm.xlu0 %849, %v768
        %v851 = vpop.permute.xlu0 %850
        %854 = vset.pattern.permute.xlu0 0
        %855 = vperm.xlu0 %854, %v769
        %v856 = vpop.permute.xlu0 %855
        %v858 = vmul.f32 %v572, %v806
        %v859 = vmul.f32 %v573, %v806
        %v860 = vmul.f32 %v574, %v811
        %v861 = vmul.f32 %v575, %v811
        %v862 = vmul.f32 %v576, %v816
        %v863 = vmul.f32 %v577, %v816
        %v864 = vmul.f32 %v578, %v821
        %v865 = vmul.f32 %v579, %v821
        %v866 = vmul.f32 %v580, %v826
        %v867 = vmul.f32 %v581, %v826
        %v868 = vmul.f32 %v582, %v831
        %v869 = vmul.f32 %v583, %v831
        %v870 = vmul.f32 %v584, %v836
        %v871 = vmul.f32 %v585, %v836
        %v872 = vmul.f32 %v586, %v841
        %v873 = vmul.f32 %v587, %v841
        %v874 = vmul.f32 %v588, %v846
        %v875 = vmul.f32 %v589, %v846
        %v876 = vmul.f32 %v590, %v851
        %v877 = vmul.f32 %v591, %v851
        %v878 = vmul.f32 %v592, %v856
        %v879 = vmul.f32 %v593, %v856
        %881 = vset.pattern.permute.xlu0 0
        %882 = vperm.xlu0 %881, %v792
        %v883 = vpop.permute.xlu0 %882
        %886 = vset.pattern.permute.xlu0 0
        %887 = vperm.xlu0 %886, %v793
        %v888 = vpop.permute.xlu0 %887
        %891 = vset.pattern.permute.xlu0 0
        %892 = vperm.xlu0 %891, %v794
        %v893 = vpop.permute.xlu0 %892
        %896 = vset.pattern.permute.xlu0 0
        %897 = vperm.xlu0 %896, %v795
        %v898 = vpop.permute.xlu0 %897
        %901 = vset.pattern.permute.xlu0 0
        %902 = vperm.xlu0 %901, %v796
        %v903 = vpop.permute.xlu0 %902
        %906 = vset.pattern.permute.xlu0 0
        %907 = vperm.xlu0 %906, %v797
        %v908 = vpop.permute.xlu0 %907
        %911 = vset.pattern.permute.xlu0 0
        %912 = vperm.xlu0 %911, %v798
        %v913 = vpop.permute.xlu0 %912
        %916 = vset.pattern.permute.xlu0 0
        %917 = vperm.xlu0 %916, %v799
        %v918 = vpop.permute.xlu0 %917
        %921 = vset.pattern.permute.xlu0 0
        %922 = vperm.xlu0 %921, %v800
        %v923 = vpop.permute.xlu0 %922
        %926 = vset.pattern.permute.xlu0 0
        %927 = vperm.xlu0 %926, %v801
        %v928 = vpop.permute.xlu0 %927
        %931 = vset.pattern.permute.xlu0 0
        %932 = vperm.xlu0 %931, %v802
        %v933 = vpop.permute.xlu0 %932
        %v935 = vadd.f32 %v858, %v883
        %v936 = vadd.f32 %v859, %v883
        %v937 = vadd.f32 %v860, %v888
        %v938 = vadd.f32 %v861, %v888
        %v939 = vadd.f32 %v862, %v893
        %v940 = vadd.f32 %v863, %v893
        %v941 = vadd.f32 %v864, %v898
        %v942 = vadd.f32 %v865, %v898
        %v943 = vadd.f32 %v866, %v903
        %v944 = vadd.f32 %v867, %v903
        %v945 = vadd.f32 %v868, %v908
        %v946 = vadd.f32 %v869, %v908
        %v947 = vadd.f32 %v870, %v913
        %v948 = vadd.f32 %v871, %v913
        %v949 = vadd.f32 %v872, %v918
        %v950 = vadd.f32 %v873, %v918
        %v951 = vadd.f32 %v874, %v923
        %v952 = vadd.f32 %v875, %v923
        %v953 = vadd.f32 %v876, %v928
        %v954 = vadd.f32 %v877, %v928
        %v955 = vadd.f32 %v878, %v933
        %v956 = vadd.f32 %v879, %v933
        %957 = vst [vmem:[%s248] sm:$0xff] %v935
        %958 = vst [vmem:[%s248 + $0x8] sm:$0xff] %v936
        %959 = vst [vmem:[%s248 + $0x10] sm:$0xff] %v937
        %960 = vst [vmem:[%s248 + $0x18] sm:$0xff] %v938
        %961 = vst [vmem:[%s248 + $0x20] sm:$0xff] %v939
        %962 = vst [vmem:[%s248 + $0x28] sm:$0xff] %v940
        %963 = vst [vmem:[%s248 + $0x30] sm:$0xff] %v941
        %964 = vst [vmem:[%s248 + $0x38] sm:$0xff] %v942
        %965 = vst [vmem:[%s248 + $0x40] sm:$0xff] %v943
        %966 = vst [vmem:[%s248 + $0x48] sm:$0xff] %v944
        %967 = vst [vmem:[%s248 + $0x50] sm:$0xff] %v945
        %968 = vst [vmem:[%s248 + $0x58] sm:$0xff] %v946
        %969 = vst [vmem:[%s248 + $0x60] sm:$0xff] %v947
        %970 = vst [vmem:[%s248 + $0x68] sm:$0xff] %v948
        %971 = vst [vmem:[%s248 + $0x70] sm:$0xff] %v949
        %972 = vst [vmem:[%s248 + $0x78] sm:$0xff] %v950
        %973 = vst [vmem:[%s248 + $0x80] sm:$0xff] %v951
        %974 = vst [vmem:[%s248 + $0x88] sm:$0xff] %v952
        %975 = vst [vmem:[%s248 + $0x90] sm:$0xff] %v953
        %976 = vst [vmem:[%s248 + $0x98] sm:$0xff] %v954
        %977 = vst [vmem:[%s248 + $0xa0] sm:$0xff] %v955
        %978 = vst [vmem:[%s248 + $0xa8] sm:$0xff] %v956
        %s979 = sand.u32 %s128, 1
        %s980 = scalar_lea.sflag [#allocation5], %s979
        %s981 = sand.u32 %s128, 1
        %s982 = smul.addr %s981, 176
        %s983 = scalar_lea.vmem [#allocation6], %s982
        // Predicated region
        $region41: #{tpu_custom_call.1} parent=35 // pred_check
          %p984 = pneg %p138
        $region42: #{tpu_custom_call.1} parent=35 // pred_check_branch
          %986 = sbr.rel (%p984) target = $region44
        $region43: #{tpu_custom_call.1} parent=35 // pred_region
          %s987 = smul.u32 11, %s21
          %s989 = ssub.s32 2816, 2816
          %990 = vsyncadd %s980, %s989
          %s991 = smul.addr %s987, 2
          %s992 = smul.addr %s991, 128
          %s993 = scalar_lea.hbm %s4, %s992
          %s994 = sshll.u32 %s983, 4
          %s995 = int_to_ptr.vmem [resolvable:$true] %s994
          %1000 = dma.vmem_to_hbm [thread:$0]  %s995, 2816, %s993, %s980, 256, 256, 16
        $region44: #{tpu_custom_call.1} parent=35 // pred_fallthru
          _
      $region36: #{tpu_custom_call.1} parent=5 // pred_fallthru
        _
      %p1001 = scmp.le.s32.totalorder 2, %s16
      // Predicated region
      $region45: #{tpu_custom_call.1} parent=5 // pred_check
        %p1002 = pneg %p1001
      $region46: #{tpu_custom_call.1} parent=5 // pred_check_branch
        %1004 = sbr.rel (%p1002) target = $region48
      $region47: #{tpu_custom_call.1} parent=5 // pred_region
        %s1005 = ssub.s32 %s16, 2
        // Predicated region
        $region49: #{tpu_custom_call.1} parent=47 // pred_check
          %p1006 = pneg %p144
        $region50: #{tpu_custom_call.1} parent=47 // pred_check_branch
          %1008 = sbr.rel (%p1006) target = $region52
        $region51: #{tpu_custom_call.1} parent=47 // pred_region
          %s1009 = sand.u32 %s129, 1
          %s1010 = scalar_lea.sflag [#allocation5], %s1009
          %s1011 = sand.u32 %s129, 1
          %s1012 = smul.addr %s1011, 176
          %s1013 = scalar_lea.vmem [#allocation6], %s1012
          %1014 = dma.done %s1010, 2816
        $region52: #{tpu_custom_call.1} parent=47 // pred_fallthru
          _
      $region48: #{tpu_custom_call.1} parent=5 // pred_fallthru
        _
    $region6: #{tpu_custom_call.1} parent=1 // loop_footer
      %s20 = sadd.s32 1, %s16
    $region7: #{tpu_custom_call.1} parent=1 // loop_footer_branch
      %15 = sbr.rel target = $region3
    $region8: #{tpu_custom_call.1} parent=1 // loop_exit
      _
    %1015 = vsyncpa [#allocation4], 1
    %s1016 = scalar_lea.sflag [#allocation4], 1
    %1017 = vsyncpa %s1016, 1
    %1018 = vsyncpa [#allocation5], 1
    %s1019 = scalar_lea.sflag [#allocation5], 1
    %1020 = vsyncpa %s1019, 1

</llo_original>
